<compile_context>
chip_gen: v7x
topology: tpu7x:2x2x1
jax: 0.10.0
libtpu: 0.0.40
codegen_flags: <defaults>
</compile_context>

<pallas_src>
import functools

import jax
import jax.numpy as jnp
from jax.experimental import pallas as pl
from jax.experimental.pallas import tpu as pltpu


# ----------------------------------------------------------------------------
# Generation-aware sizing.
# ----------------------------------------------------------------------------
@functools.lru_cache(maxsize=1)
def _gen_params():
    """Returns (target_block_bytes, vmem_limit_bytes, vmem_cap_bytes, min_grid_steps)."""
    try:
        kind = jax.devices()[0].device_kind.lower()
    except Exception:
        kind = ""
    if ("v7" in kind) or (kind == ""):
        # v7x: 64 MiB VMEM per TC and 2 TCs/chip -> modest tiles, and force the
        # grid to have >= 2 steps along a parallel axis so both cores stream.
        return (2 * 1024 * 1024, 32 * 1024 * 1024, 56 * 1024 * 1024, 2)
    # v4/v5e/v6e: 128 MiB VMEM, single TensorCore -> bigger tiles amortize the
    # ~0.35 us/step pipeline overhead (few-% HBM-roofline gain on big shapes).
    return (4 * 1024 * 1024, 64 * 1024 * 1024, 100 * 1024 * 1024, 1)


def _round_down(x, m):
    return max(m, (x // m) * m)


# ----------------------------------------------------------------------------
# channels_first: (C, T) blocks, reduce over the C (sublane) axis.
# ----------------------------------------------------------------------------
def _ln_cf_kernel(x_ref, w_ref, b_ref, o_ref, *, eps):
    x = x_ref[...].astype(jnp.float32)               # (C, T)
    mean = jnp.mean(x, axis=0, keepdims=True)        # cross-sublane reduce (XLU)
    xc = x - mean                                    # reused by var and output
    var = jnp.mean(xc * xc, axis=0, keepdims=True)   # biased variance (two-pass)
    inv = jax.lax.rsqrt(var + eps)                   # per-lane (1, T)
    # w/b are per-sublane (C,1), inv is per-lane (1,T): any "scale/shift"
    # prefold would itself be a full (C,T) tile, so the 3-op epilogue below is
    # already minimal.  Broadcasts are implicit in the VPU ops (no extra pass).
    o_ref[...] = (xc * inv * w_ref[...] + b_ref[...]).astype(o_ref.dtype)


def _layernorm_channels_first(x, weight, bias, eps):
    target, vmem_limit, vmem_cap, min_steps = _gen_params()
    n, c, h, w = x.shape
    hw = h * w
    itemsize = x.dtype.itemsize
    x3 = x.reshape(n, c, hw)                         # free (contiguous) reshape

    if hw * c * itemsize <= target:
        t = hw                                       # full extent: always legal
    else:
        t = _round_down(target // (c * itemsize), 128)
        if t >= hw:
            t = hw                                   # full extent fallback

    # v7x: guarantee >= 2 grid steps so both TensorCores get work.
    if n * pl.cdiv(hw, t) < min_steps and hw >= 256:
        t = _round_down(pl.cdiv(hw, 2), 128)

    # VMEM guard: t is clamped to >=128 (or full hw), so for very large C the
    # double-buffered in+out blocks plus f32 temporaries can exceed the scoped
    # limit.  Raise it (capped per generation) so Mosaic doesn't reject on v7x.
    # TODO(synk): for extreme C (>~16K) reduce input buffering (pl.Buffered)
    # instead of only raising the limit.
    needed = 4 * c * t * itemsize + 3 * c * t * 4
    vmem_limit = max(vmem_limit, min(needed, vmem_cap))

    w2 = weight.astype(jnp.float32).reshape(c, 1)
    b2 = bias.astype(jnp.float32).reshape(c, 1)

    out = pl.pallas_call(
        functools.partial(_ln_cf_kernel, eps=eps),
        out_shape=jax.ShapeDtypeStruct((n, c, hw), x.dtype),
        grid_spec=pltpu.PrefetchScalarGridSpec(
            num_scalar_prefetch=0,
            grid=(n, pl.cdiv(hw, t)),
            in_specs=[
                pl.BlockSpec((None, c, t), lambda i, j: (i, 0, j)),
                pl.BlockSpec((c, 1), lambda i, j: (0, 0)),
                pl.BlockSpec((c, 1), lambda i, j: (0, 0)),
            ],
            out_specs=pl.BlockSpec((None, c, t), lambda i, j: (i, 0, j)),
        ),
        compiler_params=pltpu.CompilerParams(
            dimension_semantics=("parallel", "parallel"),
            vmem_limit_bytes=vmem_limit),
    )(x3, w2, b2)
    return out.reshape(n, c, h, w)


# ----------------------------------------------------------------------------
# channels_last, small C: lane-packed (rows/G, 128) blocks; per-group stats via
# a block-diagonal 128x128 matmul on the idle MXU.  Padded channel lanes are
# excluded from the stats by zeroing their rows in the seg matrix.
# ----------------------------------------------------------------------------
def _ln_cl_packed_kernel(x_ref, seg_ref, w_ref, b_ref, o_ref, *, inv_c, eps):
    # x_ref: (TR, 128); every 128-lane row packs G = 128 // Cp logical rows.
    x = x_ref[...].astype(jnp.float32)
    seg = seg_ref[...]                               # (128, 128) block-diagonal
    mean = jnp.dot(x, seg, preferred_element_type=jnp.float32) * inv_c
    xc = x - mean                                    # reused by var and output
    var = jnp.dot(xc * xc, seg, preferred_element_type=jnp.float32) * inv_c
    inv = jax.lax.rsqrt(var + eps)
    # mean/inv are already full (TR,128) tiles (group-broadcast by the matmul),
    # so the review's scale/shift prefold would add ops, not remove them.
    o_ref[...] = (xc * inv * w_ref[...] + b_ref[...]).astype(o_ref.dtype)


def _pad_vec(v, cp):
    c = v.shape[0]
    return v if cp == c else jnp.pad(v, (0, cp - c))


def _layernorm_cl_packed(x2d, weight, bias, eps, c_real, cp):
    """x2d: (rows, cp), rows % (128//cp) == 0, channels >= c_real zero-padded."""
    target, vmem_limit, _, min_steps = _gen_params()
    rows, _ = x2d.shape
    g = 128 // cp
    rows_p = rows // g
    itemsize = x2d.dtype.itemsize
    xp = x2d.reshape(rows_p, 128)                    # free (contiguous) reshape

    if rows_p * 128 * itemsize <= target:
        row_tile = rows_p                            # full extent: always legal
    else:
        row_tile = _round_down(target // (128 * itemsize), 8)

    # v7x: guarantee >= 2 grid steps so both TensorCores get work.
    if pl.cdiv(rows_p, row_tile) < min_steps and rows_p >= 16:
        row_tile = _round_down(pl.cdiv(rows_p, 2), 8)

    lane = jnp.arange(128)
    group = lane // cp
    valid = (lane % cp) < c_real                     # real (unpadded) channels
    seg = ((group[:, None] == group[None, :]) & valid[:, None]).astype(jnp.float32)

    wt = jnp.tile(_pad_vec(weight.astype(jnp.float32), cp), g).reshape(1, 128)
    bt = jnp.tile(_pad_vec(bias.astype(jnp.float32), cp), g).reshape(1, 128)

    out = pl.pallas_call(
        functools.partial(_ln_cl_packed_kernel, inv_c=1.0 / c_real, eps=eps),
        out_shape=jax.ShapeDtypeStruct((rows_p, 128), x2d.dtype),
        grid_spec=pltpu.PrefetchScalarGridSpec(
            num_scalar_prefetch=0,
            grid=(pl.cdiv(rows_p, row_tile),),
            in_specs=[
                pl.BlockSpec((row_tile, 128), lambda i: (i, 0)),
                pl.BlockSpec((128, 128), lambda i: (0, 0)),
                pl.BlockSpec((1, 128), lambda i: (0, 0)),
                pl.BlockSpec((1, 128), lambda i: (0, 0)),
            ],
            out_specs=pl.BlockSpec((row_tile, 128), lambda i: (i, 0)),
        ),
        compiler_params=pltpu.CompilerParams(
            dimension_semantics=("parallel",),
            vmem_limit_bytes=vmem_limit),
    )(xp, seg, wt, bt)
    return out.reshape(rows, cp)


# ----------------------------------------------------------------------------
# channels_last, large C: plain row-wise kernel over (row_tile, C).
# Only used when C > 64 (>= 50% lane utilization; fully dense when 128 | C).
# ----------------------------------------------------------------------------
def _ln_cl_rows_kernel(x_ref, w_ref, b_ref, o_ref, *, eps):
    x = x_ref[...].astype(jnp.float32)               # (TR, C)
    mean = jnp.mean(x, axis=-1, keepdims=True)
    xc = x - mean                                    # reused by var and output
    var = jnp.mean(xc * xc, axis=-1, keepdims=True)  # biased variance
    inv = jax.lax.rsqrt(var + eps)
    # w/b are per-lane (1,C), inv per-row (TR,1): a prefolded scale/shift would
    # be full (TR,C) tiles -> keep the minimal 3-op epilogue.
    o_ref[...] = (xc * inv * w_ref[...] + b_ref[...]).astype(o_ref.dtype)


def _layernorm_cl_rows(x2d, weight, bias, eps):
    target, vmem_limit, vmem_cap, min_steps = _gen_params()
    rows, c = x2d.shape
    itemsize = x2d.dtype.itemsize

    if rows * c * itemsize <= target:
        row_tile = rows                              # full extent: always legal
    else:
        row_tile = _round_down(target // (c * itemsize), 8)
        if row_tile >= rows:
            row_tile = rows

    # v7x: guarantee >= 2 grid steps so both TensorCores get work.
    if pl.cdiv(rows, row_tile) < min_steps and rows >= 16:
        row_tile = _round_down(pl.cdiv(rows, 2), 8)

    # VMEM guard for huge C (row_tile clamped to >= 8).
    needed = 4 * row_tile * c * itemsize + 3 * row_tile * c * 4
    vmem_limit = max(vmem_limit, min(needed, vmem_cap))

    w2 = weight.astype(jnp.float32).reshape(1, c)
    b2 = bias.astype(jnp.float32).reshape(1, c)

    out = pl.pallas_call(
        functools.partial(_ln_cl_rows_kernel, eps=eps),
        out_shape=jax.ShapeDtypeStruct((rows, c), x2d.dtype),
        grid_spec=pltpu.PrefetchScalarGridSpec(
            num_scalar_prefetch=0,
            grid=(pl.cdiv(rows, row_tile),),
            in_specs=[
                pl.BlockSpec((row_tile, c), lambda i: (i, 0)),
                pl.BlockSpec((1, c), lambda i: (0, 0)),
                pl.BlockSpec((1, c), lambda i: (0, 0)),
            ],
            out_specs=pl.BlockSpec((row_tile, c), lambda i: (i, 0)),
        ),
        compiler_params=pltpu.CompilerParams(
            dimension_semantics=("parallel",),
            vmem_limit_bytes=vmem_limit),
    )(x2d, w2, b2)
    return out


# ----------------------------------------------------------------------------
# Public entry point (matches the PyTorch module semantics).
# ----------------------------------------------------------------------------
def layer_norm(x, weight, bias, eps=1e-6, data_format="channels_last"):
    if data_format not in ("channels_last", "channels_first"):
        raise ValueError(f"not support data format '{data_format}'")

    if data_format == "channels_first":
        # x: (N, C, H, W); normalize over C, no transposes.
        return _layernorm_channels_first(x, weight, bias, eps)

    # channels_last: x (..., C), normalize over C.
    c = x.shape[-1]
    lead = x.shape[:-1]
    x2d = x.reshape(-1, c)
    rows = x2d.shape[0]

    if c <= 64:
        # Lane-dense packed path for all small C: pad C up to the next divisor
        # of 128 and rows up to a multiple of g; padded lanes are excluded from
        # the stats via the seg matrix and sliced off afterwards.
        cp = 1
        while cp < c:
            cp *= 2
        g = 128 // cp
        rows_pad = ((rows + g - 1) // g) * g
        need_pad = (cp != c) or (rows_pad != rows)
        xp2d = jnp.pad(x2d, ((0, rows_pad - rows), (0, cp - c))) if need_pad else x2d
        y = _layernorm_cl_packed(xp2d, weight, bias, eps, c, cp)
        if need_pad:
            y = y[:rows, :c]
    else:
        y = _layernorm_cl_rows(x2d, weight, bias, eps)
    return y.reshape(*lead, c)


# ----------------------------------------------------------------------------
# Pure-JAX reference (mirrors the PyTorch module forward).
# ----------------------------------------------------------------------------
def _reference(x, weight, bias, eps, data_format):
    xf = x.astype(jnp.float32)
    if data_format == "channels_last":
        mean = jnp.mean(xf, axis=-1, keepdims=True)
        var = jnp.mean((xf - mean) ** 2, axis=-1, keepdims=True)
        return ((xf - mean) / jnp.sqrt(var + eps)) * weight + bias
    else:
        mean = jnp.mean(xf, axis=1, keepdims=True)
        var = jnp.mean((xf - mean) ** 2, axis=1, keepdims=True)
        xn = (xf - mean) / jnp.sqrt(var + eps)
        return weight[:, None, None] * xn + bias[:, None, None]


if __name__ == "__main__":
    key = jax.random.PRNGKey(0)
    k1, k2, k3, k4, k5, k6 = jax.random.split(key, 6)

    C = 4
    eps = 1e-6   # module default (intentionally differs from torch.nn.LayerNorm's 1e-5)
    weight = jnp.ones((C,), jnp.float32) + 0.1 * jax.random.normal(k3, (C,))
    bias = jnp.zeros((C,), jnp.float32) + 0.1 * jax.random.normal(k4, (C,))

    # channels_first: (N, C, H, W) -> native NCHW kernel (no transposes).
    x_cf = jax.random.normal(k1, (2, C, 16, 16), jnp.float32)
    y_cf = jax.block_until_ready(
        layer_norm(x_cf, weight, bias, eps, data_format="channels_first"))
    ref_cf = _reference(x_cf, weight, bias, eps, "channels_first")
    assert y_cf.shape == x_cf.shape
    assert jnp.allclose(y_cf, ref_cf, atol=1e-4, rtol=1e-4)

    # channels_last: (N, H, W, C) -> lane-packed kernel (C=4 divides 128, no pad).
    x_cl = jax.random.normal(k2, (2, 16, 16, C), jnp.float32)
    y_cl = jax.block_until_ready(
        layer_norm(x_cl, weight, bias, eps, data_format="channels_last"))
    ref_cl = _reference(x_cl, weight, bias, eps, "channels_last")
    assert y_cl.shape == x_cl.shape
    assert jnp.allclose(y_cl, ref_cl, atol=1e-4, rtol=1e-4)

    # channels_last, C=6 (does not divide 128) -> padded to Cp=8, packed path.
    C2 = 6
    w2 = jnp.ones((C2,), jnp.float32) + 0.1 * jax.random.normal(k5, (C2,))
    b2 = jnp.zeros((C2,), jnp.float32) + 0.1 * jax.random.normal(k6, (C2,))
    x_cl2 = jax.random.normal(k2, (3, 5, 7, C2), jnp.float32)
    y_cl2 = jax.block_until_ready(
        layer_norm(x_cl2, w2, b2, eps, data_format="channels_last"))
    ref_cl2 = _reference(x_cl2, w2, b2, eps, "channels_last")
    assert y_cl2.shape == x_cl2.shape
    assert jnp.allclose(y_cl2, ref_cl2, atol=1e-4, rtol=1e-4)

    # channels_last, rows not a multiple of g (row padding path), C=4.
    x_cl3 = jax.random.normal(k1, (1, 3, 5, C), jnp.float32)
    y_cl3 = jax.block_until_ready(
        layer_norm(x_cl3, weight, bias, eps, data_format="channels_last"))
    ref_cl3 = _reference(x_cl3, weight, bias, eps, "channels_last")
    assert y_cl3.shape == x_cl3.shape
    assert jnp.allclose(y_cl3, ref_cl3, atol=1e-4, rtol=1e-4)

    # bf16 input exercises the dtype-aware tile sizing; looser tolerance.
    x_bf = jax.random.normal(k2, (2, 16, 16, C), jnp.float32).astype(jnp.bfloat16)
    y_bf = jax.block_until_ready(
        layer_norm(x_bf, weight, bias, eps, data_format="channels_last"))
    ref_bf = _reference(x_bf.astype(jnp.float32), weight, bias, eps, "channels_last")
    assert y_bf.shape == x_bf.shape
    assert jnp.allclose(y_bf.astype(jnp.float32), ref_bf, atol=3e-2, rtol=3e-2)

    print("KERNEL_OK")
</pallas_src>

<mosaic_0001>
module attributes {stable_mosaic.version = 11 : i64} {
  func.func @_ln_cf_kernel(%arg0: i32, %arg1: i32, %arg2: memref<1x4x256xf32, #tpu.memory_space<vmem>>, %arg3: memref<4x1xf32, #tpu.memory_space<vmem>>, %arg4: memref<4x1xf32, #tpu.memory_space<vmem>>, %arg5: memref<1x4x256xf32, #tpu.memory_space<vmem>>) attributes {dimension_semantics = [#tpu.dimension_semantics<parallel>, #tpu.dimension_semantics<parallel>], iteration_bounds = array<i64: 2, 1>, scalar_prefetch = 0 : i64, scratch_operands = 0 : i64, tpu.core_type = #tpu.core_type<tc>, window_params = [{transform_indices = @transform_0, window_bounds = array<i64: 1, 4, 256>}, {pipeline_mode = #tpu.pipeline_mode<synchronous>, transform_indices = @transform_1, window_bounds = array<i64: 4, 1>}, {pipeline_mode = #tpu.pipeline_mode<synchronous>, transform_indices = @transform_2, window_bounds = array<i64: 4, 1>}, {transform_indices = @transform_3, window_bounds = array<i64: 1, 4, 256>}]} {
    %c0 = arith.constant 0 : index
    %c0_0 = arith.constant 0 : index
    %c0_1 = arith.constant 0 : index
    %0 = vector.load %arg2[%c0, %c0_0, %c0_1] : memref<1x4x256xf32, #tpu.memory_space<vmem>>, vector<1x4x256xf32>
    %1 = vector.shape_cast %0 : vector<1x4x256xf32> to vector<4x256xf32>
    %cst = arith.constant dense<0.000000e+00> : vector<256xf32>
    %2 = vector.multi_reduction <add>, %1, %cst [0] : vector<4x256xf32> to vector<256xf32>
    %3 = vector.shape_cast %2 : vector<256xf32> to vector<1x256xf32>
    %cst_2 = arith.constant 4.000000e+00 : f32
    %4 = vector.broadcast %cst_2 : f32 to vector<1x256xf32>
    %5 = arith.divf %3, %4 : vector<1x256xf32>
    %6 = vector.broadcast %5 : vector<1x256xf32> to vector<4x256xf32>
    %7 = arith.subf %1, %6 : vector<4x256xf32>
    %8 = arith.mulf %7, %7 : vector<4x256xf32>
    %cst_3 = arith.constant dense<0.000000e+00> : vector<256xf32>
    %9 = vector.multi_reduction <add>, %8, %cst_3 [0] : vector<4x256xf32> to vector<256xf32>
    %10 = vector.shape_cast %9 : vector<256xf32> to vector<1x256xf32>
    %cst_4 = arith.constant 4.000000e+00 : f32
    %11 = vector.broadcast %cst_4 : f32 to vector<1x256xf32>
    %12 = arith.divf %10, %11 : vector<1x256xf32>
    %cst_5 = arith.constant 9.99999997E-7 : f32
    %13 = vector.broadcast %cst_5 : f32 to vector<1x256xf32>
    %14 = arith.addf %12, %13 : vector<1x256xf32>
    %15 = math.rsqrt %14 : vector<1x256xf32>
    %16 = vector.broadcast %15 : vector<1x256xf32> to vector<4x256xf32>
    %17 = arith.mulf %7, %16 : vector<4x256xf32>
    %c0_6 = arith.constant 0 : index
    %c0_7 = arith.constant 0 : index
    %18 = vector.load %arg3[%c0_6, %c0_7] : memref<4x1xf32, #tpu.memory_space<vmem>>, vector<4x1xf32>
    %19 = vector.broadcast %18 : vector<4x1xf32> to vector<4x256xf32>
    %20 = arith.mulf %17, %19 : vector<4x256xf32>
    %c0_8 = arith.constant 0 : index
    %c0_9 = arith.constant 0 : index
    %21 = vector.load %arg4[%c0_8, %c0_9] : memref<4x1xf32, #tpu.memory_space<vmem>>, vector<4x1xf32>
    %22 = vector.broadcast %21 : vector<4x1xf32> to vector<4x256xf32>
    %23 = arith.addf %20, %22 : vector<4x256xf32>
    %c0_10 = arith.constant 0 : index
    %c0_11 = arith.constant 0 : index
    %c0_12 = arith.constant 0 : index
    %24 = vector.load %arg5[%c0_10, %c0_11, %c0_12] : memref<1x4x256xf32, #tpu.memory_space<vmem>>, vector<1x4x256xf32>
    %25 = vector.shape_cast %24 : vector<1x4x256xf32> to vector<4x256xf32>
    %26 = vector.shape_cast %23 : vector<4x256xf32> to vector<1x4x256xf32>
    tpu.vector_store %arg5[%c0_10, %c0_11, %c0_12], %26 {strides = array<i32>} : memref<1x4x256xf32, #tpu.memory_space<vmem>>, vector<1x4x256xf32>,
    return
  }
  func.func @transform_0(%arg0: i32, %arg1: i32) -> (i32, i32, i32) {
    %c0_i32 = arith.constant 0 : i32
    %c0_i32_0 = arith.constant 0 : i32
    return %arg0, %c0_i32, %arg1 : i32, i32, i32
  }
  func.func @transform_1(%arg0: i32, %arg1: i32) -> (i32, i32) {
    %c0_i32 = arith.constant 0 : i32
    %c0_i32_0 = arith.constant 0 : i32
    %c0_i32_1 = arith.constant 0 : i32
    return %c0_i32, %c0_i32_0 : i32, i32
  }
  func.func @transform_2(%arg0: i32, %arg1: i32) -> (i32, i32) {
    %c0_i32 = arith.constant 0 : i32
    %c0_i32_0 = arith.constant 0 : i32
    %c0_i32_1 = arith.constant 0 : i32
    return %c0_i32, %c0_i32_0 : i32, i32
  }
  func.func @transform_3(%arg0: i32, %arg1: i32) -> (i32, i32, i32) {
    %c0_i32 = arith.constant 0 : i32
    %c0_i32_0 = arith.constant 0 : i32
    return %arg0, %c0_i32, %arg1 : i32, i32, i32
  }
}

</mosaic_0001>

<llo_original>
// kernel: tpu_custom_call.1
$region0: #{tpu_custom_call.1}
  #allocation0 [shape = 'u32[]', space=smem, size = 0x4, offset = 0x4, fixed_abs, tag = 'smem constant byte address 0x4 - core index']
  #allocation1 [shape = 'u32[144,128]{1,0:T(1,128)}', space=vmem, size = 0x12000, scoped, tag = 'internal scratch']
  %s0 = inlined_call_operand.hbm [shape: f32[2,4,256], index: 0, kind: input, shape index: {}]
  %s1 = inlined_call_operand.hbm [shape: f32[4,1], index: 1, kind: input, shape index: {}]
  %s2 = inlined_call_operand.hbm [shape: f32[4,1], index: 2, kind: input, shape index: {}]
  %s3 = inlined_call_operand.hbm [shape: f32[2,4,256], index: 3, kind: output, shape index: {}]
  %s4 = sld [smem:[#allocation0]]
  $region57: #{tpu_custom_call.1} parent=0
    _
  %s6 = ssub.s32 1, %s4
  %s7 = scalar_select 0, %s6, %s4
  $region1: #{tpu_custom_call.1} parent=0
    #allocation2 [shape = 'u8[8192]{0}', space=vmem, size = 0x2000, scoped, tag = 'input window, operand 0']
    #allocation3 [shape = 's32[2]{0}', space=sflag, size = 0x8, scoped, tag = 'scoped memory for tpu_custom_call.1']
    #allocation4 [shape = 's32[2]{0}', space=sflag, size = 0x8, scoped, tag = 'scoped memory for tpu_custom_call.1']
    #allocation5 [shape = 'u8[2048]{0}', space=vmem, size = 0x800, scoped, tag = 'input window, operand 1, single buffered']
    #allocation6 [shape = 's32[1]{0}', space=sflag, size = 0x4, scoped, tag = 'scoped memory for tpu_custom_call.1']
    #allocation7 [shape = 'u8[2048]{0}', space=vmem, size = 0x800, scoped, tag = 'input window, operand 2, single buffered']
    #allocation8 [shape = 'u8[8192]{0}', space=vmem, size = 0x2000, scoped, tag = 'output window, operand 0']
    %8 = vsyncpa [#allocation3], 0
    %s9 = scalar_lea.sflag [#allocation3], 1
    %10 = vsyncpa %s9, 0
    %11 = vsyncpa [#allocation6], 0
    %12 = vsyncpa [#allocation4], 0
    %s13 = scalar_lea.sflag [#allocation4], 1
    %14 = vsyncpa %s13, 0
    loop: start=0, step=1, limit=4
    $region2: #{tpu_custom_call.1} parent=1 // loop_pre_header
      _
    $region3: #{tpu_custom_call.1} parent=1 // loop_header
      %s16 = sphi 0, %s20
      %p17 = scmp.ge.s32.totalorder %s16, 4
      %s23 = sphi 0, %s35
      %s24 = sphi 0, %s31
      %s25 = sphi 0, %s23
      %s26 = sphi 0, %s24
      %s27 = sphi 0, %s25
      %s28 = sphi 0, %s26
      %s40 = sphi 0, %s42
      %s43 = sphi 0, %s40
      %s44 = sphi 0, %s43
      %s60 = sphi 0, %s44
      %s64 = sphi 0, %s64
      %s66 = sphi 0, %s64
      %s67 = sphi 0, %s66
      %s81 = sphi 0, %s67
      %s85 = sphi 0, %s85
      %s87 = sphi 0, %s85
      %s88 = sphi 0, %s87
      %s102 = sphi 0, %s88
      %s110 = sphi 0, %s112
      %s113 = sphi 0, %s110
      %s114 = sphi 0, %s113
      %s130 = sphi 0, %s114
    $region4: #{tpu_custom_call.1} parent=1 // loop_header_branch
      %19 = sbr.rel (%p17) target = $region8
    $region5: #{tpu_custom_call.1} parent=1 // loop_body
      %s21 = ssub.s32 %s16, 1
      %s22 = ssub.s32 %s16, 2
      %s29 = sadd.s32 1, %s24
      %p30 = scmp.ge.s32.totalorder %s29, 1
      %s31 = scalar_select %p30, 0, %s29
      %s32 = sadd.s32 1, %s23
      %s33 = scalar_select %p30, %s32, %s23
      %p34 = scmp.ge.s32.totalorder %s33, 2
      %s35 = scalar_select %p34, 0, %s33
      %s36 = ssub.s32 %s23, %s35
      %s37 = ssub.s32 %s24, %s31
      %s38 = sor.u32 %s36, %s37
      %p39 = scmp.eq.s32.totalorder %s38, 0
      %s41 = sadd.s32 %s40, 1
      %s42 = scalar_select %p39, %s40, %s41
      %p45 = pneg %p39
      %p46 = scmp.eq.s32.totalorder %s16, 1
      %p47 = por %p45, %p46
      %p48 = scmp.ne.s32.totalorder %s40, %s43
      %p49 = scmp.eq.s32.totalorder %s16, 0
      %p50 = por %p48, %p49
      %p51 = scmp.ne.s32.totalorder %s40, %s43
      %p52 = scmp.eq.s32.totalorder %s21, 1
      %p53 = por %p51, %p52
      %p54 = scmp.ne.s32.totalorder %s43, %s44
      %p55 = scmp.eq.s32.totalorder %s21, 0
      %p56 = por %p54, %p55
      %p57 = scmp.ne.s32.totalorder %s43, %s44
      %p58 = scmp.eq.s32.totalorder %s22, 1
      %p59 = por %p57, %p58
      %p61 = scmp.ne.s32.totalorder %s44, %s60
      %p62 = scmp.eq.s32.totalorder %s22, 0
      %p63 = por %p61, %p62
      %s65 = sadd.s32 %s64, 1
      %p68 = scmp.eq.s32.totalorder %s16, 1
      %p69 = scmp.ne.s32.totalorder %s64, %s66
      %p70 = scmp.eq.s32.totalorder %s16, 0
      %p71 = por %p69, %p70
      %p72 = scmp.ne.s32.totalorder %s64, %s66
      %p73 = scmp.eq.s32.totalorder %s21, 1
      %p74 = por %p72, %p73
      %p75 = scmp.ne.s32.totalorder %s66, %s67
      %p76 = scmp.eq.s32.totalorder %s21, 0
      %p77 = por %p75, %p76
      %p78 = scmp.ne.s32.totalorder %s66, %s67
      %p79 = scmp.eq.s32.totalorder %s22, 1
      %p80 = por %p78, %p79
      %p82 = scmp.ne.s32.totalorder %s67, %s81
      %p83 = scmp.eq.s32.totalorder %s22, 0
      %p84 = por %p82, %p83
      %s86 = sadd.s32 %s85, 1
      %p89 = scmp.eq.s32.totalorder %s16, 1
      %p90 = scmp.ne.s32.totalorder %s85, %s87
      %p91 = scmp.eq.s32.totalorder %s16, 0
      %p92 = por %p90, %p91
      %p93 = scmp.ne.s32.totalorder %s85, %s87
      %p94 = scmp.eq.s32.totalorder %s21, 1
      %p95 = por %p93, %p94
      %p96 = scmp.ne.s32.totalorder %s87, %s88
      %p97 = scmp.eq.s32.totalorder %s21, 0
      %p98 = por %p96, %p97
      %p99 = scmp.ne.s32.totalorder %s87, %s88
      %p100 = scmp.eq.s32.totalorder %s22, 1
      %p101 = por %p99, %p100
      %p103 = scmp.ne.s32.totalorder %s88, %s102
      %p104 = scmp.eq.s32.totalorder %s22, 0
      %p105 = por %p103, %p104
      %s106 = ssub.s32 %s23, %s35
      %s107 = ssub.s32 %s24, %s31
      %s108 = sor.u32 %s106, %s107
      %p109 = scmp.eq.s32.totalorder %s108, 0
      %s111 = sadd.s32 %s110, 1
      %s112 = scalar_select %p109, %s110, %s111
      %p115 = pneg %p109
      %p116 = scmp.eq.s32.totalorder %s16, 1
      %p117 = por %p115, %p116
      %p118 = scmp.ne.s32.totalorder %s110, %s113
      %p119 = scmp.eq.s32.totalorder %s16, 0
      %p120 = por %p118, %p119
      %p121 = scmp.ne.s32.totalorder %s110, %s113
      %p122 = scmp.eq.s32.totalorder %s21, 1
      %p123 = por %p121, %p122
      %p124 = scmp.ne.s32.totalorder %s113, %s114
      %p125 = scmp.eq.s32.totalorder %s21, 0
      %p126 = por %p124, %p125
      %p127 = scmp.ne.s32.totalorder %s113, %s114
      %p128 = scmp.eq.s32.totalorder %s22, 1
      %p129 = por %p127, %p128
      %p131 = scmp.ne.s32.totalorder %s114, %s130
      %p132 = scmp.eq.s32.totalorder %s22, 0
      %p133 = por %p131, %p132
      %p134 = scmp.le.s32.totalorder 1, %s16
      %p135 = scmp.lt.s32.totalorder %s16, 3
      %p136 = pnand %p134, %p135
      %p137 = pneg %p136
      // Predicated region
      $region9: #{tpu_custom_call.1} parent=5 // pred_check
        _
      $region10: #{tpu_custom_call.1} parent=5 // pred_check_branch
        %139 = sbr.rel (%p136) target = $region12
      $region11: #{tpu_custom_call.1} parent=5 // pred_region
        %s140 = ssub.s32 %s16, 1
        // Predicated region
        $region13: #{tpu_custom_call.1} parent=11 // pred_check
          %p141 = pneg %p77
        $region14: #{tpu_custom_call.1} parent=11 // pred_check_branch
          %143 = sbr.rel (%p141) target = $region16
        $region15: #{tpu_custom_call.1} parent=11 // pred_region
          %s145 = ssub.s32 64, 64
          %146 = vsyncadd [#allocation6], %s145
          %s148 = sshll.u32 [#allocation5], 4
          %s149 = int_to_ptr.vmem [resolvable:$true] %s148
          %151 = dma.hbm_to_vmem [thread:$0]  %s1, 64, %s149, [#allocation6]
        $region16: #{tpu_custom_call.1} parent=11 // pred_fallthru
          _
        // Predicated region
        $region17: #{tpu_custom_call.1} parent=11 // pred_check
          %p152 = pneg %p98
        $region18: #{tpu_custom_call.1} parent=11 // pred_check_branch
          %154 = sbr.rel (%p152) target = $region20
        $region19: #{tpu_custom_call.1} parent=11 // pred_region
          %s156 = ssub.s32 64, 64
          %157 = vsyncadd [#allocation6], %s156
          %s159 = sshll.u32 [#allocation7], 4
          %s160 = int_to_ptr.vmem [resolvable:$true] %s159
          %162 = dma.hbm_to_vmem [thread:$0]  %s2, 64, %s160, [#allocation6]
        $region20: #{tpu_custom_call.1} parent=11 // pred_fallthru
          _
      $region12: #{tpu_custom_call.1} parent=5 // pred_fallthru
        _
      %p163 = scmp.lt.s32.totalorder %s16, 2
      // Predicated region
      $region21: #{tpu_custom_call.1} parent=5 // pred_check
        %p164 = pneg %p163
      $region22: #{tpu_custom_call.1} parent=5 // pred_check_branch
        %166 = sbr.rel (%p164) target = $region24
      $region23: #{tpu_custom_call.1} parent=5 // pred_region
        // Predicated region
        $region25: #{tpu_custom_call.1} parent=23 // pred_check
          %p167 = pneg %p50
        $region26: #{tpu_custom_call.1} parent=23 // pred_check_branch
          %169 = sbr.rel (%p167) target = $region28
        $region27: #{tpu_custom_call.1} parent=23 // pred_region
          %s170 = sand.u32 %s40, 1
          %s171 = scalar_lea.sflag [#allocation3], %s170
          %s172 = sand.u32 %s40, 1
          %s173 = smul.addr %s172, 8
          %s174 = scalar_lea.vmem [#allocation2], %s173
          %s175 = smul.u32 2, %s24
          %s177 = ssub.s32 128, 128
          %178 = vsyncadd %s171, %s177
          %s179 = smul.addr %s23, 2
          %s180 = sadd.s32 %s175, %s179
          %s181 = smul.addr %s180, 64
          %s182 = scalar_lea.hbm %s0, %s181
          %s184 = sshll.u32 %s174, 4
          %s185 = int_to_ptr.vmem [resolvable:$true] %s184
          %187 = dma.hbm_to_vmem [thread:$0]  %s182, 128, %s185, %s171
        $region28: #{tpu_custom_call.1} parent=23 // pred_fallthru
          _
      $region24: #{tpu_custom_call.1} parent=5 // pred_fallthru
        _
      %p188 = scmp.le.s32.totalorder 1, %s16
      %p189 = scmp.lt.s32.totalorder %s16, 3
      %p190 = pnand %p188, %p189
      %p191 = pneg %p190
      // Predicated region
      $region29: #{tpu_custom_call.1} parent=5 // pred_check
        _
      $region30: #{tpu_custom_call.1} parent=5 // pred_check_branch
        %193 = sbr.rel (%p190) target = $region32
      $region31: #{tpu_custom_call.1} parent=5 // pred_region
        %s194 = ssub.s32 %s16, 1
        %s195 = sand.u32 %s43, 1
        %s196 = scalar_lea.sflag [#allocation3], %s195
        %s197 = sand.u32 %s43, 1
        %s198 = smul.addr %s197, 8
        %s199 = scalar_lea.vmem [#allocation2], %s198
        // Predicated region
        $region33: #{tpu_custom_call.1} parent=31 // pred_check
          %p200 = pneg %p56
        $region34: #{tpu_custom_call.1} parent=31 // pred_check_branch
          %202 = sbr.rel (%p200) target = $region36
        $region35: #{tpu_custom_call.1} parent=31 // pred_region
          %203 = dma.done %s196, 128
        $region36: #{tpu_custom_call.1} parent=31 // pred_fallthru
          _
        // Predicated region
        $region37: #{tpu_custom_call.1} parent=31 // pred_check
          %p204 = pneg %p77
        $region38: #{tpu_custom_call.1} parent=31 // pred_check_branch
          %206 = sbr.rel (%p204) target = $region40
        $region39: #{tpu_custom_call.1} parent=31 // pred_region
          %207 = dma.done [#allocation6], 64
        $region40: #{tpu_custom_call.1} parent=31 // pred_fallthru
          _
        // Predicated region
        $region41: #{tpu_custom_call.1} parent=31 // pred_check
          %p208 = pneg %p98
        $region42: #{tpu_custom_call.1} parent=31 // pred_check_branch
          %210 = sbr.rel (%p208) target = $region44
        $region43: #{tpu_custom_call.1} parent=31 // pred_region
          %211 = dma.done [#allocation6], 64
        $region44: #{tpu_custom_call.1} parent=31 // pred_fallthru
          _
        %s212 = sand.u32 %s43, 1
        %s213 = scalar_lea.sflag [#allocation3], %s212
        %s214 = sand.u32 %s43, 1
        %s215 = smul.addr %s214, 8
        %s216 = scalar_lea.vmem [#allocation2], %s215
        %p217 = pneg %p56
        %p218 = pneg %p53
        %p219 = pneg %p77
        %p220 = pneg %p74
        %p221 = pneg %p98
        %p222 = pneg %p95
        %p223 = pneg %p126
        %p224 = pneg %p123
        %s225 = sand.u32 %s113, 1
        %s226 = scalar_lea.sflag [#allocation4], %s225
        %s227 = sand.u32 %s113, 1
        %s228 = smul.addr %s227, 8
        %s229 = scalar_lea.vmem [#allocation8], %s228
        %s230 = smul.u32 2, %s26
        %s231 = smul.u32 2, %s26
        %v232 = vld [vmem:[%s199] sm:$0xff]
        %v234 = vcombine.high %v232, %v232
        %vm236 = vcmask 1043456
        %v237 = vsel %vm236, %v232, 0.0
        %v238 = vrot.slane %v237, 4
        %v239 = vadd.f32 %v237, %v238
        %v240 = vrot.slane %v239, 2
        %v241 = vadd.f32 %v239, %v240
        %v242 = vrot.slane %v241, 1
        %v243 = vadd.f32 %v241, %v242
        %v244 = vsel %vm236, %v234, 0.0
        %v245 = vrot.slane %v244, 4
        %v246 = vadd.f32 %v244, %v245
        %v247 = vrot.slane %v246, 2
        %v248 = vadd.f32 %v246, %v247
        %v249 = vrot.slane %v248, 1
        %v250 = vadd.f32 %v248, %v249
        %v251 = vrcp.pop 4.0
        %v252 = vmul.f32 %v243, %v251
        %v253 = vmul.f32 %v250, %v251
        %v256 = vcombine.low %v252, %v253
        %v258 = vsub.f32 %v232, %v256
        %v259 = vmul.f32 %v258, %v258
        %v261 = vcombine.high %v259, %v259
        %v263 = vsel %vm236, %v259, 0.0
        %v264 = vrot.slane %v263, 4
        %v265 = vadd.f32 %v263, %v264
        %v266 = vrot.slane %v265, 2
        %v267 = vadd.f32 %v265, %v266
        %v268 = vrot.slane %v267, 1
        %v269 = vadd.f32 %v267, %v268
        %v270 = vsel %vm236, %v261, 0.0
        %v271 = vrot.slane %v270, 4
        %v272 = vadd.f32 %v270, %v271
        %v273 = vrot.slane %v272, 2
        %v274 = vadd.f32 %v272, %v273
        %v275 = vrot.slane %v274, 1
        %v276 = vadd.f32 %v274, %v275
        %v277 = vmul.f32 %v269, %v251
        %v278 = vmul.f32 %v276, %v251
        %v279 = vadd.f32 %v277, 1e-06
        %v280 = vadd.f32 %v278, 1e-06
        %v281 = vrsqrt.pop %v279
        %v282 = vrsqrt.pop %v280
        %v285 = vcombine.low %v281, %v282
        %v287 = vmul.f32 %v258, %v285
        %v288 = vld [vmem:[#allocation5] sm:$0xf]
        %290 = vset.pattern.permute.xlu0 0
        %291 = vperm.xlu0 %290, %v288
        %v292 = vpop.permute.xlu0 %291
        %v294 = vunpack.c.l.s4 839922192
        %v295 = vunpack.c.0.s8 %v294
        %v296 = vlaneseq
        %v297 = vshrl.u32 %v296, 7
        %v298 = vsub.s32 %v295, %v297
        %v299 = vrot.slane %v292, %v298
        %v301 = vmul.f32 %v287, %v299
        %v302 = vld [vmem:[#allocation7] sm:$0xf]
        %304 = vset.pattern.permute.xlu0 0
        %305 = vperm.xlu0 %304, %v302
        %v306 = vpop.permute.xlu0 %305
        %v308 = vunpack.c.l.s4 839922192
        %v309 = vunpack.c.0.s8 %v308
        %v310 = vlaneseq
        %v311 = vshrl.u32 %v310, 7
        %v312 = vsub.s32 %v309, %v311
        %v313 = vrot.slane %v306, %v312
        %v315 = vadd.f32 %v301, %v313
        %316 = vst [vmem:[%s229] sm:$0xff] %v315
        %s317 = sand.u32 %s113, 1
        %s318 = scalar_lea.sflag [#allocation4], %s317
        %s319 = sand.u32 %s113, 1
        %s320 = smul.addr %s319, 8
        %s321 = scalar_lea.vmem [#allocation8], %s320
        // Predicated region
        $region45: #{tpu_custom_call.1} parent=31 // pred_check
          %p322 = pneg %p123
        $region46: #{tpu_custom_call.1} parent=31 // pred_check_branch
          %324 = sbr.rel (%p322) target = $region48
        $region47: #{tpu_custom_call.1} parent=31 // pred_region
          %s325 = smul.u32 2, %s26
          %s327 = ssub.s32 128, 128
          %328 = vsyncadd %s318, %s327
          %s329 = smul.addr %s25, 2
          %s330 = sadd.s32 %s325, %s329
          %s331 = smul.addr %s330, 64
          %s332 = scalar_lea.hbm %s3, %s331
          %s334 = sshll.u32 %s321, 4
          %s335 = int_to_ptr.vmem [resolvable:$true] %s334
          %337 = dma.vmem_to_hbm [thread:$0]  %s335, 128, %s332, %s318
        $region48: #{tpu_custom_call.1} parent=31 // pred_fallthru
          _
      $region32: #{tpu_custom_call.1} parent=5 // pred_fallthru
        _
      %p338 = scmp.le.s32.totalorder 2, %s16
      // Predicated region
      $region49: #{tpu_custom_call.1} parent=5 // pred_check
        %p339 = pneg %p338
      $region50: #{tpu_custom_call.1} parent=5 // pred_check_branch
        %341 = sbr.rel (%p339) target = $region52
      $region51: #{tpu_custom_call.1} parent=5 // pred_region
        %s342 = ssub.s32 %s16, 2
        // Predicated region
        $region53: #{tpu_custom_call.1} parent=51 // pred_check
          %p343 = pneg %p129
        $region54: #{tpu_custom_call.1} parent=51 // pred_check_branch
          %345 = sbr.rel (%p343) target = $region56
        $region55: #{tpu_custom_call.1} parent=51 // pred_region
          %s346 = sand.u32 %s114, 1
          %s347 = scalar_lea.sflag [#allocation4], %s346
          %s348 = sand.u32 %s114, 1
          %s349 = smul.addr %s348, 8
          %s350 = scalar_lea.vmem [#allocation8], %s349
          %351 = dma.done %s347, 128
        $region56: #{tpu_custom_call.1} parent=51 // pred_fallthru
          _
      $region52: #{tpu_custom_call.1} parent=5 // pred_fallthru
        _
    $region6: #{tpu_custom_call.1} parent=1 // loop_footer
      %s20 = sadd.s32 1, %s16
    $region7: #{tpu_custom_call.1} parent=1 // loop_footer_branch
      %15 = sbr.rel target = $region3
    $region8: #{tpu_custom_call.1} parent=1 // loop_exit
      _
    %352 = vsyncpa [#allocation3], 1
    %s353 = scalar_lea.sflag [#allocation3], 1
    %354 = vsyncpa %s353, 1
    %355 = vsyncpa [#allocation6], 1
    %356 = vsyncpa [#allocation4], 1
    %s357 = scalar_lea.sflag [#allocation4], 1
    %358 = vsyncpa %s357, 1

</llo_original>
